<compile_context>
chip_gen: v7x
topology: tpu7x:2x2x1
jax: 0.10.0
libtpu: 0.0.40
codegen_flags: <defaults>
</compile_context>

<pallas_src>
import jax
import jax.numpy as jnp
from jax.experimental import pallas as pl
from jax.experimental.pallas import tpu as pltpu


def _round_up(a: int, b: int) -> int:
    return pl.cdiv(a, b) * b


def _vmem_capacity_bytes() -> int:
    """Physical per-core VMEM; conservative (v7x-sized) fallback if unknown."""
    try:
        return int(pltpu.get_tpu_info().vmem_capacity_bytes)
    except Exception:
        return 64 << 20


def _plan_tiles(c, nc, hw, itemsize, budget):
    """Pick (tile_nc, tile_hw, w_bufs) so the working set fits `budget` bytes.

    Working set per grid step:
      weight tile : w_bufs * tile_nc * c        (w_bufs=1 when nc is untiled)
      x tile      : 2 * c * tile_hw             (double-buffered)
      out tile    : 2 * tile_nc * tile_hw       (double-buffered)
    """
    hw128 = _round_up(hw, 128)
    target_hw = min(512, hw128)  # want >= 512 lanes unless hw itself is smaller

    tile_nc = nc
    while True:
        w_bufs = 1 if tile_nc == nc else 2   # grid-invariant weight -> 1 buffer
        w_tile_bytes = w_bufs * tile_nc * c * itemsize
        per_lane = 2 * (c + tile_nc) * itemsize
        avail = budget - w_tile_bytes
        if avail >= per_lane * target_hw or tile_nc <= 8:
            break
        # Weight too big for a decent lane tile: tile num_classes instead.
        tile_nc = max(8, ((tile_nc // 2) // 8) * 8)

    if avail >= per_lane * hw:
        # Whole hw row-slab fits per step: full-extent block, no masking at all.
        tile_hw = hw
    else:
        tile_hw = max(128, (avail // per_lane // 128) * 128)
        tile_hw = min(tile_hw, hw128)
        if tile_hw >= hw:
            tile_hw = hw
    return tile_nc, tile_hw, w_bufs


def _cam_mask_kernel(w_ref, x_ref, o_ref):
    # w_ref: (tile_nc, c)          -- weight tile (grid-invariant when nc untiled)
    # x_ref: (c, tile_hw)          -- lane-dense slab of one batch element
    # o_ref: (tile_nc, tile_hw)    -- matching CAM slab
    o_ref[...] = jnp.dot(
        w_ref[...], x_ref[...], preferred_element_type=jnp.float32
    ).astype(o_ref.dtype)


def cam_mask_forward(x, fc_weight, *, vmem_budget_bytes=None):
    """x: (bs, c, h, w); fc_weight: (num_classes, c) = nn.Linear.weight.

    Returns cam: (bs, num_classes, h*w), identical to CAMMask.forward(x).
    """
    bs, c, h, w = x.shape
    num_classes = fc_weight.shape[0]
    hw = h * w
    itemsize = jnp.dtype(x.dtype).itemsize

    # ---- VMEM budget: generation-aware (v5e/v6e: 128 MiB phys, v7x: 64 MiB) ---
    vmem_phys = _vmem_capacity_bytes()
    if vmem_budget_bytes is None:
        vmem_budget_bytes = min(96 << 20, int(vmem_phys * 0.70))
    vmem_cap = int(vmem_phys * 0.80)  # never request all of physical VMEM (v7x!)

    # ---- sublane-align num_classes (unmasked output stores); usually a no-op --
    nc_pad = _round_up(num_classes, 8)
    if nc_pad != num_classes:
        fc_weight = jnp.pad(fc_weight, ((0, nc_pad - num_classes), (0, 0)))

    # ---- pick tiles ------------------------------------------------------------
    tile_nc, tile_hw, w_bufs = _plan_tiles(c, nc_pad, hw, itemsize, vmem_budget_bytes)
    nc_tiles = pl.cdiv(nc_pad, tile_nc)
    hw_tiles = pl.cdiv(hw, tile_hw)

    # ---- glue: flatten spatial dims (torch .view(bs, c, w*h)); NO hw padding ---
    # Ragged trailing hw / nc blocks are masked by Pallas at the array edge, so
    # there is no wrapper-side jnp.pad of x and no trailing hw slice of the
    # output (each would cost an extra full HBM round trip of a mem-bound op).
    x_flat = x.reshape(bs, c, hw)
    # TODO(synk): if model semantics allow, feed x / fc_weight as bfloat16 from
    # upstream (accumulation stays f32 via preferred_element_type) to halve the
    # HBM traffic of this bandwidth-bound op.

    footprint = (w_bufs * tile_nc * c + 2 * (c + tile_nc) * tile_hw) * itemsize
    vmem_limit = int(min(vmem_cap, max(32 << 20, footprint + (8 << 20))))

    cost = pl.CostEstimate(
        flops=2 * bs * nc_pad * c * hw,
        transcendentals=0,
        bytes_accessed=(bs * c * hw + nc_pad * c + bs * nc_pad * hw) * itemsize,
    )

    def build(w_pipeline_mode):
        if w_pipeline_mode is None:
            w_spec = pl.BlockSpec((tile_nc, c), lambda b, n, t: (n, 0))
        else:
            w_spec = pl.BlockSpec((tile_nc, c), lambda b, n, t: (n, 0),
                                  pipeline_mode=w_pipeline_mode)
        return pl.pallas_call(
            _cam_mask_kernel,
            out_shape=jax.ShapeDtypeStruct((bs, nc_pad, hw), x.dtype),
            grid_spec=pltpu.PrefetchScalarGridSpec(
                num_scalar_prefetch=0,
                grid=(bs, nc_tiles, hw_tiles),
                in_specs=[
                    w_spec,
                    # one (batch, hw-tile) slab per step; batch dim squeezed away
                    pl.BlockSpec((pl.Squeezed(), c, tile_hw),
                                 lambda b, n, t: (b, 0, t)),
                ],
                out_specs=pl.BlockSpec((pl.Squeezed(), tile_nc, tile_hw),
                                       lambda b, n, t: (b, n, t)),
            ),
            compiler_params=pltpu.CompilerParams(
                # TODO(synk): on v7x, confirm megacore sharding in the bundle dump
                # and switch the leading axis to pltpu.CORE_PARALLEL if needed.
                dimension_semantics=("parallel", "parallel", "parallel"),
                vmem_limit_bytes=vmem_limit,
            ),
            cost_estimate=cost,
        )

    # Grid-invariant weight -> single buffer (its block index never changes when
    # nc is untiled, so a second buffer would never be filled).
    want_single = (nc_tiles == 1 and w_bufs == 1)
    try:
        out = build(pl.Buffered(1) if want_single else None)(fc_weight, x_flat)
    except Exception:
        # Fallback for Pallas builds that reject pipeline_mode on pallas_call.
        out = build(None)(fc_weight, x_flat)

    if nc_pad != num_classes:
        out = out[:, :num_classes, :]
    return out


if __name__ == "__main__":
    # Small shapes consistent with the module.
    bs, c, h, w = 2, 4, 16, 16
    num_classes = 8

    key = jax.random.PRNGKey(0)
    kx, kw = jax.random.split(key)
    x = jax.random.normal(kx, (bs, c, h, w), dtype=jnp.float32)
    # Deterministic stand-in for nn.Linear(in_channels, num_classes, bias=False).weight
    fc_weight = jax.random.normal(kw, (num_classes, c), dtype=jnp.float32) * 0.1

    cam = cam_mask_forward(x, fc_weight)
    cam = jax.block_until_ready(cam)

    # Pure-JAX reference of the PyTorch CAMMask.forward.
    x_flat = x.reshape(bs, c, h * w)
    ref = jnp.einsum("kc,bcp->bkp", fc_weight, x_flat)

    assert cam.shape == (bs, num_classes, h * w), cam.shape
    assert jnp.allclose(cam, ref, atol=1e-5, rtol=1e-5)

    print("KERNEL_OK")
</pallas_src>

<mosaic_0001>
module attributes {stable_mosaic.version = 11 : i64} {
  func.func @_cam_mask_kernel(%arg0: i32, %arg1: i32, %arg2: i32, %arg3: memref<8x4xf32, #tpu.memory_space<vmem>>, %arg4: memref<1x4x256xf32, #tpu.memory_space<vmem>>, %arg5: memref<1x8x256xf32, #tpu.memory_space<vmem>>) attributes {dimension_semantics = [#tpu.dimension_semantics<parallel>, #tpu.dimension_semantics<parallel>, #tpu.dimension_semantics<parallel>], iteration_bounds = array<i64: 2, 1, 1>, scalar_prefetch = 0 : i64, scratch_operands = 0 : i64, tpu.core_type = #tpu.core_type<tc>, window_params = [{pipeline_mode = #tpu.pipeline_mode<synchronous>, transform_indices = @transform_0, window_bounds = array<i64: 8, 4>}, {transform_indices = @transform_1, window_bounds = array<i64: 1, 4, 256>}, {transform_indices = @transform_2, window_bounds = array<i64: 1, 8, 256>}]} {
    %c0 = arith.constant 0 : index
    %c0_0 = arith.constant 0 : index
    %0 = vector.load %arg3[%c0, %c0_0] : memref<8x4xf32, #tpu.memory_space<vmem>>, vector<8x4xf32>
    %c0_1 = arith.constant 0 : index
    %c0_2 = arith.constant 0 : index
    %c0_3 = arith.constant 0 : index
    %1 = vector.load %arg4[%c0_1, %c0_2, %c0_3] : memref<1x4x256xf32, #tpu.memory_space<vmem>>, vector<1x4x256xf32>
    %2 = vector.shape_cast %1 : vector<1x4x256xf32> to vector<4x256xf32>
    %cst = arith.constant dense<0.000000e+00> : vector<8x256xf32>
    %3 = tpu.matmul %0, %2, %cst {dimension_numbers = #tpu.dot_dimension_numbers<[1], [0], [0], [1], [0, 0, 1, 1], [], []>} : vector<8x4xf32>, vector<4x256xf32>, vector<8x256xf32> -> vector<8x256xf32>
    %c0_4 = arith.constant 0 : index
    %c0_5 = arith.constant 0 : index
    %c0_6 = arith.constant 0 : index
    %4 = vector.load %arg5[%c0_4, %c0_5, %c0_6] : memref<1x8x256xf32, #tpu.memory_space<vmem>>, vector<1x8x256xf32>
    %5 = vector.shape_cast %4 : vector<1x8x256xf32> to vector<8x256xf32>
    %6 = vector.shape_cast %3 : vector<8x256xf32> to vector<1x8x256xf32>
    tpu.vector_store %arg5[%c0_4, %c0_5, %c0_6], %6 {strides = array<i32>} : memref<1x8x256xf32, #tpu.memory_space<vmem>>, vector<1x8x256xf32>,
    return
  }
  func.func @transform_0(%arg0: i32, %arg1: i32, %arg2: i32) -> (i32, i32) {
    %c0_i32 = arith.constant 0 : i32
    %c0_i32_0 = arith.constant 0 : i32
    return %arg1, %c0_i32 : i32, i32
  }
  func.func @transform_1(%arg0: i32, %arg1: i32, %arg2: i32) -> (i32, i32, i32) {
    %c0_i32 = arith.constant 0 : i32
    %c0_i32_0 = arith.constant 0 : i32
    return %arg0, %c0_i32, %arg2 : i32, i32, i32
  }
  func.func @transform_2(%arg0: i32, %arg1: i32, %arg2: i32) -> (i32, i32, i32) {
    %c0_i32 = arith.constant 0 : i32
    return %arg0, %arg1, %arg2 : i32, i32, i32
  }
}

module attributes {stable_mosaic.version = 11 : i64} {
  func.func @_cam_mask_kernel(%arg0: i32, %arg1: i32, %arg2: i32, %arg3: memref<8x4xf32, #tpu.memory_space<vmem>>, %arg4: memref<1x4x256xf32, #tpu.memory_space<vmem>>, %arg5: memref<1x8x256xf32, #tpu.memory_space<vmem>>) attributes {dimension_semantics = [#tpu.dimension_semantics<parallel>, #tpu.dimension_semantics<parallel>, #tpu.dimension_semantics<parallel>], iteration_bounds = array<i64: 2, 1, 1>, scalar_prefetch = 0 : i64, scratch_operands = 0 : i64, tpu.core_type = #tpu.core_type<tc>, window_params = [{transform_indices = @transform_0, window_bounds = array<i64: 8, 4>}, {transform_indices = @transform_1, window_bounds = array<i64: 1, 4, 256>}, {transform_indices = @transform_2, window_bounds = array<i64: 1, 8, 256>}]} {
    %c0 = arith.constant 0 : index
    %c0_0 = arith.constant 0 : index
    %0 = vector.load %arg3[%c0, %c0_0] : memref<8x4xf32, #tpu.memory_space<vmem>>, vector<8x4xf32>
    %c0_1 = arith.constant 0 : index
    %c0_2 = arith.constant 0 : index
    %c0_3 = arith.constant 0 : index
    %1 = vector.load %arg4[%c0_1, %c0_2, %c0_3] : memref<1x4x256xf32, #tpu.memory_space<vmem>>, vector<1x4x256xf32>
    %2 = vector.shape_cast %1 : vector<1x4x256xf32> to vector<4x256xf32>
    %cst = arith.constant dense<0.000000e+00> : vector<8x256xf32>
    %3 = tpu.matmul %0, %2, %cst {dimension_numbers = #tpu.dot_dimension_numbers<[1], [0], [0], [1], [0, 0, 1, 1], [], []>} : vector<8x4xf32>, vector<4x256xf32>, vector<8x256xf32> -> vector<8x256xf32>
    %c0_4 = arith.constant 0 : index
    %c0_5 = arith.constant 0 : index
    %c0_6 = arith.constant 0 : index
    %4 = vector.load %arg5[%c0_4, %c0_5, %c0_6] : memref<1x8x256xf32, #tpu.memory_space<vmem>>, vector<1x8x256xf32>
    %5 = vector.shape_cast %4 : vector<1x8x256xf32> to vector<8x256xf32>
    %6 = vector.shape_cast %3 : vector<8x256xf32> to vector<1x8x256xf32>
    tpu.vector_store %arg5[%c0_4, %c0_5, %c0_6], %6 {strides = array<i32>} : memref<1x8x256xf32, #tpu.memory_space<vmem>>, vector<1x8x256xf32>,
    return
  }
  func.func @transform_0(%arg0: i32, %arg1: i32, %arg2: i32) -> (i32, i32) {
    %c0_i32 = arith.constant 0 : i32
    %c0_i32_0 = arith.constant 0 : i32
    return %arg1, %c0_i32 : i32, i32
  }
  func.func @transform_1(%arg0: i32, %arg1: i32, %arg2: i32) -> (i32, i32, i32) {
    %c0_i32 = arith.constant 0 : i32
    %c0_i32_0 = arith.constant 0 : i32
    return %arg0, %c0_i32, %arg2 : i32, i32, i32
  }
  func.func @transform_2(%arg0: i32, %arg1: i32, %arg2: i32) -> (i32, i32, i32) {
    %c0_i32 = arith.constant 0 : i32
    return %arg0, %arg1, %arg2 : i32, i32, i32
  }
}

</mosaic_0001>

<llo_original>
// kernel: tpu_custom_call.1
$region0: #{tpu_custom_call.1}
  #allocation0 [shape = 'u32[]', space=smem, size = 0x4, offset = 0x4, fixed_abs, tag = 'smem constant byte address 0x4 - core index']
  #allocation1 [shape = 'u32[144,128]{1,0:T(1,128)}', space=vmem, size = 0x12000, scoped, tag = 'internal scratch']
  %s0 = inlined_call_operand.vmem [shape: f32[8,4], index: 0, kind: input, shape index: {}]
  %s1 = inlined_call_operand.hbm [shape: f32[2,4,256], index: 1, kind: input, shape index: {}]
  %s2 = inlined_call_operand.hbm [shape: f32[2,8,256], index: 2, kind: output, shape index: {}]
  %s3 = sld [smem:[#allocation0]]
  $region45: #{tpu_custom_call.1} parent=0
    _
  %s5 = ssub.s32 1, %s3
  %s6 = scalar_select 0, %s5, %s3
  $region1: #{tpu_custom_call.1} parent=0
    #allocation2 [shape = 'u8[8192]{0}', space=vmem, size = 0x2000, scoped, tag = 'input window, operand 1']
    #allocation3 [shape = 's32[2]{0}', space=sflag, size = 0x8, scoped, tag = 'scoped memory for tpu_custom_call.1']
    #allocation4 [shape = 's32[2]{0}', space=sflag, size = 0x8, scoped, tag = 'scoped memory for tpu_custom_call.1']
    #allocation5 [shape = 'u8[16384]{0}', space=vmem, size = 0x4000, scoped, tag = 'output window, operand 0']
    %7 = vsyncpa [#allocation3], 0
    %s8 = scalar_lea.sflag [#allocation3], 1
    %9 = vsyncpa %s8, 0
    %10 = vsyncpa [#allocation4], 0
    %s11 = scalar_lea.sflag [#allocation4], 1
    %12 = vsyncpa %s11, 0
    loop: start=0, step=1, limit=4
    $region2: #{tpu_custom_call.1} parent=1 // loop_pre_header
      _
    $region3: #{tpu_custom_call.1} parent=1 // loop_header
      %s14 = sphi 0, %s18
      %p15 = scmp.ge.s32.totalorder %s14, 4
      %s21 = sphi 0, %s40
      %s22 = sphi 0, %s36
      %s23 = sphi 0, %s32
      %s24 = sphi 0, %s21
      %s25 = sphi 0, %s22
      %s26 = sphi 0, %s23
      %s27 = sphi 0, %s24
      %s28 = sphi 0, %s25
      %s29 = sphi 0, %s26
      %s43 = sphi 0, %s45
      %s46 = sphi 0, %s43
      %s47 = sphi 0, %s46
      %s63 = sphi 0, %s47
      %s71 = sphi 0, %s73
      %s74 = sphi 0, %s71
      %s75 = sphi 0, %s74
      %s91 = sphi 0, %s75
      %s101 = sphi 0, %s103
      %s104 = sphi 0, %s101
      %s105 = sphi 0, %s104
      %s121 = sphi 0, %s105
    $region4: #{tpu_custom_call.1} parent=1 // loop_header_branch
      %17 = sbr.rel (%p15) target = $region8
    $region5: #{tpu_custom_call.1} parent=1 // loop_body
      %s19 = ssub.s32 %s14, 1
      %s20 = ssub.s32 %s14, 2
      %s30 = sadd.s32 1, %s23
      %p31 = scmp.ge.s32.totalorder %s30, 1
      %s32 = scalar_select %p31, 0, %s30
      %s33 = sadd.s32 1, %s22
      %s34 = scalar_select %p31, %s33, %s22
      %p35 = scmp.ge.s32.totalorder %s34, 1
      %s36 = scalar_select %p35, 0, %s34
      %s37 = sadd.s32 1, %s21
      %s38 = scalar_select %p35, %s37, %s21
      %p39 = scmp.ge.s32.totalorder %s38, 2
      %s40 = scalar_select %p39, 0, %s38
      %s41 = ssub.s32 %s22, %s36
      %p42 = scmp.eq.s32.totalorder %s41, 0
      %s44 = sadd.s32 %s43, 1
      %s45 = scalar_select %p42, %s43, %s44
      %p48 = pneg %p42
      %p49 = scmp.eq.s32.totalorder %s14, 1
      %p50 = por %p48, %p49
      %p51 = scmp.ne.s32.totalorder %s43, %s46
      %p52 = scmp.eq.s32.totalorder %s14, 0
      %p53 = por %p51, %p52
      %p54 = scmp.ne.s32.totalorder %s43, %s46
      %p55 = scmp.eq.s32.totalorder %s19, 1
      %p56 = por %p54, %p55
      %p57 = scmp.ne.s32.totalorder %s46, %s47
      %p58 = scmp.eq.s32.totalorder %s19, 0
      %p59 = por %p57, %p58
      %p60 = scmp.ne.s32.totalorder %s46, %s47
      %p61 = scmp.eq.s32.totalorder %s20, 1
      %p62 = por %p60, %p61
      %p64 = scmp.ne.s32.totalorder %s47, %s63
      %p65 = scmp.eq.s32.totalorder %s20, 0
      %p66 = por %p64, %p65
      %s67 = ssub.s32 %s21, %s40
      %s68 = ssub.s32 %s23, %s32
      %s69 = sor.u32 %s67, %s68
      %p70 = scmp.eq.s32.totalorder %s69, 0
      %s72 = sadd.s32 %s71, 1
      %s73 = scalar_select %p70, %s71, %s72
      %p76 = pneg %p70
      %p77 = scmp.eq.s32.totalorder %s14, 1
      %p78 = por %p76, %p77
      %p79 = scmp.ne.s32.totalorder %s71, %s74
      %p80 = scmp.eq.s32.totalorder %s14, 0
      %p81 = por %p79, %p80
      %p82 = scmp.ne.s32.totalorder %s71, %s74
      %p83 = scmp.eq.s32.totalorder %s19, 1
      %p84 = por %p82, %p83
      %p85 = scmp.ne.s32.totalorder %s74, %s75
      %p86 = scmp.eq.s32.totalorder %s19, 0
      %p87 = por %p85, %p86
      %p88 = scmp.ne.s32.totalorder %s74, %s75
      %p89 = scmp.eq.s32.totalorder %s20, 1
      %p90 = por %p88, %p89
      %p92 = scmp.ne.s32.totalorder %s75, %s91
      %p93 = scmp.eq.s32.totalorder %s20, 0
      %p94 = por %p92, %p93
      %s95 = ssub.s32 %s21, %s40
      %s96 = ssub.s32 %s22, %s36
      %s97 = sor.u32 %s95, %s96
      %s98 = ssub.s32 %s23, %s32
      %s99 = sor.u32 %s97, %s98
      %p100 = scmp.eq.s32.totalorder %s99, 0
      %s102 = sadd.s32 %s101, 1
      %s103 = scalar_select %p100, %s101, %s102
      %p106 = pneg %p100
      %p107 = scmp.eq.s32.totalorder %s14, 1
      %p108 = por %p106, %p107
      %p109 = scmp.ne.s32.totalorder %s101, %s104
      %p110 = scmp.eq.s32.totalorder %s14, 0
      %p111 = por %p109, %p110
      %p112 = scmp.ne.s32.totalorder %s101, %s104
      %p113 = scmp.eq.s32.totalorder %s19, 1
      %p114 = por %p112, %p113
      %p115 = scmp.ne.s32.totalorder %s104, %s105
      %p116 = scmp.eq.s32.totalorder %s19, 0
      %p117 = por %p115, %p116
      %p118 = scmp.ne.s32.totalorder %s104, %s105
      %p119 = scmp.eq.s32.totalorder %s20, 1
      %p120 = por %p118, %p119
      %p122 = scmp.ne.s32.totalorder %s105, %s121
      %p123 = scmp.eq.s32.totalorder %s20, 0
      %p124 = por %p122, %p123
      %p125 = scmp.le.s32.totalorder 1, %s14
      %p126 = scmp.lt.s32.totalorder %s14, 3
      %p127 = pnand %p125, %p126
      %p128 = pneg %p127
      // Predicated region
      $region9: #{tpu_custom_call.1} parent=5 // pred_check
        _
      $region10: #{tpu_custom_call.1} parent=5 // pred_check_branch
        %130 = sbr.rel (%p127) target = $region12
      $region11: #{tpu_custom_call.1} parent=5 // pred_region
        %s131 = ssub.s32 %s14, 1
        // Predicated region
        $region13: #{tpu_custom_call.1} parent=11 // pred_check
          %p132 = pneg %p59
        $region14: #{tpu_custom_call.1} parent=11 // pred_check_branch
          %134 = sbr.rel (%p132) target = $region16
        $region15: #{tpu_custom_call.1} parent=11 // pred_region
          %p135 = scmp.lt.s32.totalorder %s25, 0
          %s136 = scalar_select %p135, %s25, 0
          %s137 = smul.addr %s136, 8
          %s138 = scalar_lea.vmem %s0, %s137
        $region16: #{tpu_custom_call.1} parent=11 // pred_fallthru
          _
      $region12: #{tpu_custom_call.1} parent=5 // pred_fallthru
        _
      %p139 = scmp.lt.s32.totalorder %s14, 2
      // Predicated region
      $region17: #{tpu_custom_call.1} parent=5 // pred_check
        %p140 = pneg %p139
      $region18: #{tpu_custom_call.1} parent=5 // pred_check_branch
        %142 = sbr.rel (%p140) target = $region20
      $region19: #{tpu_custom_call.1} parent=5 // pred_region
        // Predicated region
        $region21: #{tpu_custom_call.1} parent=19 // pred_check
          %p143 = pneg %p81
        $region22: #{tpu_custom_call.1} parent=19 // pred_check_branch
          %145 = sbr.rel (%p143) target = $region24
        $region23: #{tpu_custom_call.1} parent=19 // pred_region
          %s146 = sand.u32 %s71, 1
          %s147 = scalar_lea.sflag [#allocation3], %s146
          %s148 = sand.u32 %s71, 1
          %s149 = smul.addr %s148, 8
          %s150 = scalar_lea.vmem [#allocation2], %s149
          %s151 = smul.u32 2, %s23
          %s153 = ssub.s32 128, 128
          %154 = vsyncadd %s147, %s153
          %s155 = smul.addr %s21, 2
          %s156 = sadd.s32 %s151, %s155
          %s157 = smul.addr %s156, 64
          %s158 = scalar_lea.hbm %s1, %s157
          %s160 = sshll.u32 %s150, 4
          %s161 = int_to_ptr.vmem [resolvable:$true] %s160
          %163 = dma.hbm_to_vmem [thread:$0]  %s158, 128, %s161, %s147
        $region24: #{tpu_custom_call.1} parent=19 // pred_fallthru
          _
      $region20: #{tpu_custom_call.1} parent=5 // pred_fallthru
        _
      %p164 = scmp.le.s32.totalorder 1, %s14
      %p165 = scmp.lt.s32.totalorder %s14, 3
      %p166 = pnand %p164, %p165
      %p167 = pneg %p166
      // Predicated region
      $region25: #{tpu_custom_call.1} parent=5 // pred_check
        _
      $region26: #{tpu_custom_call.1} parent=5 // pred_check_branch
        %169 = sbr.rel (%p166) target = $region28
      $region27: #{tpu_custom_call.1} parent=5 // pred_region
        %s170 = ssub.s32 %s14, 1
        %s171 = sand.u32 %s74, 1
        %s172 = scalar_lea.sflag [#allocation3], %s171
        %s173 = sand.u32 %s74, 1
        %s174 = smul.addr %s173, 8
        %s175 = scalar_lea.vmem [#allocation2], %s174
        // Predicated region
        $region29: #{tpu_custom_call.1} parent=27 // pred_check
          %p176 = pneg %p87
        $region30: #{tpu_custom_call.1} parent=27 // pred_check_branch
          %178 = sbr.rel (%p176) target = $region32
        $region31: #{tpu_custom_call.1} parent=27 // pred_region
          %179 = dma.done %s172, 128
        $region32: #{tpu_custom_call.1} parent=27 // pred_fallthru
          _
        %p180 = scmp.lt.s32.totalorder %s25, 0
        %s181 = scalar_select %p180, %s25, 0
        %s182 = smul.addr %s181, 8
        %s183 = scalar_lea.vmem %s0, %s182
        %p184 = pneg %p59
        %p185 = pneg %p56
        %s186 = sand.u32 %s74, 1
        %s187 = scalar_lea.sflag [#allocation3], %s186
        %s188 = sand.u32 %s74, 1
        %s189 = smul.addr %s188, 8
        %s190 = scalar_lea.vmem [#allocation2], %s189
        %p191 = pneg %p87
        %p192 = pneg %p84
        %p193 = pneg %p117
        %p194 = pneg %p114
        %s195 = sand.u32 %s104, 1
        %s196 = scalar_lea.sflag [#allocation4], %s195
        %s197 = sand.u32 %s104, 1
        %s198 = smul.addr %s197, 16
        %s199 = scalar_lea.vmem [#allocation5], %s198
        %p200 = scmp.lt.s32.totalorder %s25, 0
        %s201 = scalar_select %p200, %s25, 0
        %s202 = smul.addr %s201, 8
        %s203 = scalar_lea.vmem %s0, %s202
        %s204 = smul.u32 2, %s26
        %s205 = smul.u32 2, %s26
        %v206 = vld [vmem:[%s203] sm:$0xff]
        %v207 = vld [vmem:[%s175] sm:$0xff]
        %v209 = vcombine.high %v207, %v207
        %vm210 = vcmask 31744
        %v212 = vsel %vm210, %v206, 0
        %vm214 = vcmask 1043456
        %v215 = vsel %vm214, %v207, 0
        %v217 = vsel %vm214, %v209, 0
        %219 = vmatprep.subr.mxu0 %v217
        %220 = vmatpush1.msra.mxu0 %v215
        %221 = vmatprep.subr.mxu0 0.0
        %222 = vmatpush1.msra.mxu0 0.0
        %223 = vmatprep.subr.mxu0 0.0
        %224 = vmatpush1.msra.mxu0 0.0
        %225 = vmatprep.subr.mxu0 0.0
        %226 = vmatpush1.msra.mxu0 0.0
        %227 = vmatprep.subr.mxu0 0.0
        %228 = vmatpush1.msra.mxu0 0.0
        %229 = vmatprep.subr.mxu0 0.0
        %230 = vmatpush1.msra.mxu0 0.0
        %231 = vmatprep.subr.mxu0 0.0
        %232 = vmatpush1.msra.mxu0 0.0
        %233 = vmatprep.subr.mxu0 0.0
        %234 = vmatpush1.msra.mxu0 0.0
        %235 = vmatprep.subr.mxu0 0.0
        %236 = vmatpush1.msra.mxu0 0.0
        %237 = vmatprep.subr.mxu0 0.0
        %238 = vmatpush1.msra.mxu0 0.0
        %239 = vmatprep.subr.mxu0 0.0
        %240 = vmatpush1.msra.mxu0 0.0
        %241 = vmatprep.subr.mxu0 0.0
        %242 = vmatpush1.msra.mxu0 0.0
        %243 = vmatprep.subr.mxu0 0.0
        %244 = vmatpush1.msra.mxu0 0.0
        %245 = vmatprep.subr.mxu0 0.0
        %246 = vmatpush1.msra.mxu0 0.0
        %247 = vmatprep.subr.mxu0 0.0
        %248 = vmatpush1.msra.mxu0 0.0
        %249 = vmatprep.subr.mxu0 0.0
        %250 = vmatpush1.msra.mxu0 0.0
        %251 = vmatprep.subr.mxu0 0.0
        %252 = vmatpush1.msra.mxu0 0.0
        %253 = vmatprep.subr.mxu0 0.0
        %254 = vmatpush1.msra.mxu0 0.0
        %255 = vmatprep.subr.mxu0 0.0
        %256 = vmatpush1.msra.mxu0 0.0
        %257 = vmatprep.subr.mxu0 0.0
        %258 = vmatpush1.msra.mxu0 0.0
        %259 = vmatprep.subr.mxu0 0.0
        %260 = vmatpush1.msra.mxu0 0.0
        %261 = vmatprep.subr.mxu0 0.0
        %262 = vmatpush1.msra.mxu0 0.0
        %263 = vmatprep.subr.mxu0 0.0
        %264 = vmatpush1.msra.mxu0 0.0
        %265 = vmatprep.subr.mxu0 0.0
        %266 = vmatpush1.msra.mxu0 0.0
        %267 = vmatprep.subr.mxu0 0.0
        %268 = vmatpush1.msra.mxu0 0.0
        %269 = vmatprep.subr.mxu0 0.0
        %270 = vmatpush1.msra.mxu0 0.0
        %271 = vmatprep.subr.mxu0 0.0
        %272 = vmatpush1.msra.mxu0 0.0
        %273 = vmatprep.subr.mxu0 0.0
        %274 = vmatpush1.msra.mxu0 0.0
        %275 = vmatprep.subr.mxu0 0.0
        %276 = vmatpush1.msra.mxu0 0.0
        %277 = vmatprep.subr.mxu0 0.0
        %278 = vmatpush1.msra.mxu0 0.0
        %279 = vmatprep.subr.mxu0 0.0
        %280 = vmatpush1.msra.mxu0 0.0
        %281 = vmatprep.subr.mxu0 0.0
        %282 = vmatpush1.msra.mxu0 0.0
        %283 = vmatprep.mubr.f32.mxu0 0.0
        %284 = vmatmul.mubr.f32.gmra.mrb[0].mxu0 %v212
        %v285 = vpop.f32.mrb[0].mxu0
        %v286 = vadd.f32 0.0, %v285
        %v287 = vpop.f32.mrb[0].mxu0
        %v288 = vadd.f32 0.0, %v287
        %289 = vdwg.mxu0
        %290 = vst [vmem:[%s199] sm:$0xff] %v286
        %291 = vst [vmem:[%s199 + $0x8] sm:$0xff] %v288
        %s292 = sand.u32 %s104, 1
        %s293 = scalar_lea.sflag [#allocation4], %s292
        %s294 = sand.u32 %s104, 1
        %s295 = smul.addr %s294, 16
        %s296 = scalar_lea.vmem [#allocation5], %s295
        // Predicated region
        $region33: #{tpu_custom_call.1} parent=27 // pred_check
          %p297 = pneg %p114
        $region34: #{tpu_custom_call.1} parent=27 // pred_check_branch
          %299 = sbr.rel (%p297) target = $region36
        $region35: #{tpu_custom_call.1} parent=27 // pred_region
          %s300 = smul.u32 2, %s26
          %s302 = ssub.s32 256, 256
          %303 = vsyncadd %s293, %s302
          %s304 = smul.addr %s25, 2
          %s305 = sadd.s32 %s300, %s304
          %s306 = smul.addr %s24, 2
          %s307 = sadd.s32 %s305, %s306
          %s308 = smul.addr %s307, 128
          %s309 = scalar_lea.hbm %s2, %s308
          %s311 = sshll.u32 %s296, 4
          %s312 = int_to_ptr.vmem [resolvable:$true] %s311
          %314 = dma.vmem_to_hbm [thread:$0]  %s312, 256, %s309, %s293
        $region36: #{tpu_custom_call.1} parent=27 // pred_fallthru
          _
      $region28: #{tpu_custom_call.1} parent=5 // pred_fallthru
        _
      %p315 = scmp.le.s32.totalorder 2, %s14
      // Predicated region
      $region37: #{tpu_custom_call.1} parent=5 // pred_check
        %p316 = pneg %p315
      $region38: #{tpu_custom_call.1} parent=5 // pred_check_branch
        %318 = sbr.rel (%p316) target = $region40
      $region39: #{tpu_custom_call.1} parent=5 // pred_region
        %s319 = ssub.s32 %s14, 2
        // Predicated region
        $region41: #{tpu_custom_call.1} parent=39 // pred_check
          %p320 = pneg %p120
        $region42: #{tpu_custom_call.1} parent=39 // pred_check_branch
          %322 = sbr.rel (%p320) target = $region44
        $region43: #{tpu_custom_call.1} parent=39 // pred_region
          %s323 = sand.u32 %s105, 1
          %s324 = scalar_lea.sflag [#allocation4], %s323
          %s325 = sand.u32 %s105, 1
          %s326 = smul.addr %s325, 16
          %s327 = scalar_lea.vmem [#allocation5], %s326
          %328 = dma.done %s324, 256
        $region44: #{tpu_custom_call.1} parent=39 // pred_fallthru
          _
      $region40: #{tpu_custom_call.1} parent=5 // pred_fallthru
        _
    $region6: #{tpu_custom_call.1} parent=1 // loop_footer
      %s18 = sadd.s32 1, %s14
    $region7: #{tpu_custom_call.1} parent=1 // loop_footer_branch
      %13 = sbr.rel target = $region3
    $region8: #{tpu_custom_call.1} parent=1 // loop_exit
      _
    %329 = vsyncpa [#allocation3], 1
    %s330 = scalar_lea.sflag [#allocation3], 1
    %331 = vsyncpa %s330, 1
    %332 = vsyncpa [#allocation4], 1
    %s333 = scalar_lea.sflag [#allocation4], 1
    %334 = vsyncpa %s333, 1

// kernel: tpu_custom_call.1
$region0: #{tpu_custom_call.1}
  #allocation0 [shape = 'u32[]', space=smem, size = 0x4, offset = 0x4, fixed_abs, tag = 'smem constant byte address 0x4 - core index']
  #allocation1 [shape = 'u32[144,128]{1,0:T(1,128)}', space=vmem, size = 0x12000, scoped, tag = 'internal scratch']
  %s0 = inlined_call_operand.vmem [shape: f32[8,4], index: 0, kind: input, shape index: {}]
  %s1 = inlined_call_operand.hbm [shape: f32[2,4,256], index: 1, kind: input, shape index: {}]
  %s2 = inlined_call_operand.hbm [shape: f32[2,8,256], index: 2, kind: output, shape index: {}]
  %s3 = sld [smem:[#allocation0]]
  $region45: #{tpu_custom_call.1} parent=0
    _
  %s5 = ssub.s32 1, %s3
  %s6 = scalar_select 0, %s5, %s3
  $region1: #{tpu_custom_call.1} parent=0
    #allocation2 [shape = 'u8[8192]{0}', space=vmem, size = 0x2000, scoped, tag = 'input window, operand 1']
    #allocation3 [shape = 's32[2]{0}', space=sflag, size = 0x8, scoped, tag = 'scoped memory for tpu_custom_call.1']
    #allocation4 [shape = 's32[2]{0}', space=sflag, size = 0x8, scoped, tag = 'scoped memory for tpu_custom_call.1']
    #allocation5 [shape = 'u8[16384]{0}', space=vmem, size = 0x4000, scoped, tag = 'output window, operand 0']
    %7 = vsyncpa [#allocation3], 0
    %s8 = scalar_lea.sflag [#allocation3], 1
    %9 = vsyncpa %s8, 0
    %10 = vsyncpa [#allocation4], 0
    %s11 = scalar_lea.sflag [#allocation4], 1
    %12 = vsyncpa %s11, 0
    loop: start=0, step=1, limit=4
    $region2: #{tpu_custom_call.1} parent=1 // loop_pre_header
      _
    $region3: #{tpu_custom_call.1} parent=1 // loop_header
      %s14 = sphi 0, %s18
      %p15 = scmp.ge.s32.totalorder %s14, 4
      %s21 = sphi 0, %s40
      %s22 = sphi 0, %s36
      %s23 = sphi 0, %s32
      %s24 = sphi 0, %s21
      %s25 = sphi 0, %s22
      %s26 = sphi 0, %s23
      %s27 = sphi 0, %s24
      %s28 = sphi 0, %s25
      %s29 = sphi 0, %s26
      %s43 = sphi 0, %s45
      %s46 = sphi 0, %s43
      %s47 = sphi 0, %s46
      %s63 = sphi 0, %s47
      %s71 = sphi 0, %s73
      %s74 = sphi 0, %s71
      %s75 = sphi 0, %s74
      %s91 = sphi 0, %s75
      %s101 = sphi 0, %s103
      %s104 = sphi 0, %s101
      %s105 = sphi 0, %s104
      %s121 = sphi 0, %s105
    $region4: #{tpu_custom_call.1} parent=1 // loop_header_branch
      %17 = sbr.rel (%p15) target = $region8
    $region5: #{tpu_custom_call.1} parent=1 // loop_body
      %s19 = ssub.s32 %s14, 1
      %s20 = ssub.s32 %s14, 2
      %s30 = sadd.s32 1, %s23
      %p31 = scmp.ge.s32.totalorder %s30, 1
      %s32 = scalar_select %p31, 0, %s30
      %s33 = sadd.s32 1, %s22
      %s34 = scalar_select %p31, %s33, %s22
      %p35 = scmp.ge.s32.totalorder %s34, 1
      %s36 = scalar_select %p35, 0, %s34
      %s37 = sadd.s32 1, %s21
      %s38 = scalar_select %p35, %s37, %s21
      %p39 = scmp.ge.s32.totalorder %s38, 2
      %s40 = scalar_select %p39, 0, %s38
      %s41 = ssub.s32 %s22, %s36
      %p42 = scmp.eq.s32.totalorder %s41, 0
      %s44 = sadd.s32 %s43, 1
      %s45 = scalar_select %p42, %s43, %s44
      %p48 = pneg %p42
      %p49 = scmp.eq.s32.totalorder %s14, 1
      %p50 = por %p48, %p49
      %p51 = scmp.ne.s32.totalorder %s43, %s46
      %p52 = scmp.eq.s32.totalorder %s14, 0
      %p53 = por %p51, %p52
      %p54 = scmp.ne.s32.totalorder %s43, %s46
      %p55 = scmp.eq.s32.totalorder %s19, 1
      %p56 = por %p54, %p55
      %p57 = scmp.ne.s32.totalorder %s46, %s47
      %p58 = scmp.eq.s32.totalorder %s19, 0
      %p59 = por %p57, %p58
      %p60 = scmp.ne.s32.totalorder %s46, %s47
      %p61 = scmp.eq.s32.totalorder %s20, 1
      %p62 = por %p60, %p61
      %p64 = scmp.ne.s32.totalorder %s47, %s63
      %p65 = scmp.eq.s32.totalorder %s20, 0
      %p66 = por %p64, %p65
      %s67 = ssub.s32 %s21, %s40
      %s68 = ssub.s32 %s23, %s32
      %s69 = sor.u32 %s67, %s68
      %p70 = scmp.eq.s32.totalorder %s69, 0
      %s72 = sadd.s32 %s71, 1
      %s73 = scalar_select %p70, %s71, %s72
      %p76 = pneg %p70
      %p77 = scmp.eq.s32.totalorder %s14, 1
      %p78 = por %p76, %p77
      %p79 = scmp.ne.s32.totalorder %s71, %s74
      %p80 = scmp.eq.s32.totalorder %s14, 0
      %p81 = por %p79, %p80
      %p82 = scmp.ne.s32.totalorder %s71, %s74
      %p83 = scmp.eq.s32.totalorder %s19, 1
      %p84 = por %p82, %p83
      %p85 = scmp.ne.s32.totalorder %s74, %s75
      %p86 = scmp.eq.s32.totalorder %s19, 0
      %p87 = por %p85, %p86
      %p88 = scmp.ne.s32.totalorder %s74, %s75
      %p89 = scmp.eq.s32.totalorder %s20, 1
      %p90 = por %p88, %p89
      %p92 = scmp.ne.s32.totalorder %s75, %s91
      %p93 = scmp.eq.s32.totalorder %s20, 0
      %p94 = por %p92, %p93
      %s95 = ssub.s32 %s21, %s40
      %s96 = ssub.s32 %s22, %s36
      %s97 = sor.u32 %s95, %s96
      %s98 = ssub.s32 %s23, %s32
      %s99 = sor.u32 %s97, %s98
      %p100 = scmp.eq.s32.totalorder %s99, 0
      %s102 = sadd.s32 %s101, 1
      %s103 = scalar_select %p100, %s101, %s102
      %p106 = pneg %p100
      %p107 = scmp.eq.s32.totalorder %s14, 1
      %p108 = por %p106, %p107
      %p109 = scmp.ne.s32.totalorder %s101, %s104
      %p110 = scmp.eq.s32.totalorder %s14, 0
      %p111 = por %p109, %p110
      %p112 = scmp.ne.s32.totalorder %s101, %s104
      %p113 = scmp.eq.s32.totalorder %s19, 1
      %p114 = por %p112, %p113
      %p115 = scmp.ne.s32.totalorder %s104, %s105
      %p116 = scmp.eq.s32.totalorder %s19, 0
      %p117 = por %p115, %p116
      %p118 = scmp.ne.s32.totalorder %s104, %s105
      %p119 = scmp.eq.s32.totalorder %s20, 1
      %p120 = por %p118, %p119
      %p122 = scmp.ne.s32.totalorder %s105, %s121
      %p123 = scmp.eq.s32.totalorder %s20, 0
      %p124 = por %p122, %p123
      %p125 = scmp.le.s32.totalorder 1, %s14
      %p126 = scmp.lt.s32.totalorder %s14, 3
      %p127 = pnand %p125, %p126
      %p128 = pneg %p127
      // Predicated region
      $region9: #{tpu_custom_call.1} parent=5 // pred_check
        _
      $region10: #{tpu_custom_call.1} parent=5 // pred_check_branch
        %130 = sbr.rel (%p127) target = $region12
      $region11: #{tpu_custom_call.1} parent=5 // pred_region
        %s131 = ssub.s32 %s14, 1
        // Predicated region
        $region13: #{tpu_custom_call.1} parent=11 // pred_check
          %p132 = pneg %p59
        $region14: #{tpu_custom_call.1} parent=11 // pred_check_branch
          %134 = sbr.rel (%p132) target = $region16
        $region15: #{tpu_custom_call.1} parent=11 // pred_region
          %p135 = scmp.lt.s32.totalorder %s25, 0
          %s136 = scalar_select %p135, %s25, 0
          %s137 = smul.addr %s136, 8
          %s138 = scalar_lea.vmem %s0, %s137
        $region16: #{tpu_custom_call.1} parent=11 // pred_fallthru
          _
      $region12: #{tpu_custom_call.1} parent=5 // pred_fallthru
        _
      %p139 = scmp.lt.s32.totalorder %s14, 2
      // Predicated region
      $region17: #{tpu_custom_call.1} parent=5 // pred_check
        %p140 = pneg %p139
      $region18: #{tpu_custom_call.1} parent=5 // pred_check_branch
        %142 = sbr.rel (%p140) target = $region20
      $region19: #{tpu_custom_call.1} parent=5 // pred_region
        // Predicated region
        $region21: #{tpu_custom_call.1} parent=19 // pred_check
          %p143 = pneg %p81
        $region22: #{tpu_custom_call.1} parent=19 // pred_check_branch
          %145 = sbr.rel (%p143) target = $region24
        $region23: #{tpu_custom_call.1} parent=19 // pred_region
          %s146 = sand.u32 %s71, 1
          %s147 = scalar_lea.sflag [#allocation3], %s146
          %s148 = sand.u32 %s71, 1
          %s149 = smul.addr %s148, 8
          %s150 = scalar_lea.vmem [#allocation2], %s149
          %s151 = smul.u32 2, %s23
          %s153 = ssub.s32 128, 128
          %154 = vsyncadd %s147, %s153
          %s155 = smul.addr %s21, 2
          %s156 = sadd.s32 %s151, %s155
          %s157 = smul.addr %s156, 64
          %s158 = scalar_lea.hbm %s1, %s157
          %s160 = sshll.u32 %s150, 4
          %s161 = int_to_ptr.vmem [resolvable:$true] %s160
          %163 = dma.hbm_to_vmem [thread:$0]  %s158, 128, %s161, %s147
        $region24: #{tpu_custom_call.1} parent=19 // pred_fallthru
          _
      $region20: #{tpu_custom_call.1} parent=5 // pred_fallthru
        _
      %p164 = scmp.le.s32.totalorder 1, %s14
      %p165 = scmp.lt.s32.totalorder %s14, 3
      %p166 = pnand %p164, %p165
      %p167 = pneg %p166
      // Predicated region
      $region25: #{tpu_custom_call.1} parent=5 // pred_check
        _
      $region26: #{tpu_custom_call.1} parent=5 // pred_check_branch
        %169 = sbr.rel (%p166) target = $region28
      $region27: #{tpu_custom_call.1} parent=5 // pred_region
        %s170 = ssub.s32 %s14, 1
        %s171 = sand.u32 %s74, 1
        %s172 = scalar_lea.sflag [#allocation3], %s171
        %s173 = sand.u32 %s74, 1
        %s174 = smul.addr %s173, 8
        %s175 = scalar_lea.vmem [#allocation2], %s174
        // Predicated region
        $region29: #{tpu_custom_call.1} parent=27 // pred_check
          %p176 = pneg %p87
        $region30: #{tpu_custom_call.1} parent=27 // pred_check_branch
          %178 = sbr.rel (%p176) target = $region32
        $region31: #{tpu_custom_call.1} parent=27 // pred_region
          %179 = dma.done %s172, 128
        $region32: #{tpu_custom_call.1} parent=27 // pred_fallthru
          _
        %p180 = scmp.lt.s32.totalorder %s25, 0
        %s181 = scalar_select %p180, %s25, 0
        %s182 = smul.addr %s181, 8
        %s183 = scalar_lea.vmem %s0, %s182
        %p184 = pneg %p59
        %p185 = pneg %p56
        %s186 = sand.u32 %s74, 1
        %s187 = scalar_lea.sflag [#allocation3], %s186
        %s188 = sand.u32 %s74, 1
        %s189 = smul.addr %s188, 8
        %s190 = scalar_lea.vmem [#allocation2], %s189
        %p191 = pneg %p87
        %p192 = pneg %p84
        %p193 = pneg %p117
        %p194 = pneg %p114
        %s195 = sand.u32 %s104, 1
        %s196 = scalar_lea.sflag [#allocation4], %s195
        %s197 = sand.u32 %s104, 1
        %s198 = smul.addr %s197, 16
        %s199 = scalar_lea.vmem [#allocation5], %s198
        %p200 = scmp.lt.s32.totalorder %s25, 0
        %s201 = scalar_select %p200, %s25, 0
        %s202 = smul.addr %s201, 8
        %s203 = scalar_lea.vmem %s0, %s202
        %s204 = smul.u32 2, %s26
        %s205 = smul.u32 2, %s26
        %v206 = vld [vmem:[%s203] sm:$0xff]
        %v207 = vld [vmem:[%s175] sm:$0xff]
        %v209 = vcombine.high %v207, %v207
        %vm210 = vcmask 31744
        %v212 = vsel %vm210, %v206, 0
        %vm214 = vcmask 1043456
        %v215 = vsel %vm214, %v207, 0
        %v217 = vsel %vm214, %v209, 0
        %219 = vmatprep.subr.mxu0 %v217
        %220 = vmatpush1.msra.mxu0 %v215
        %221 = vmatprep.subr.mxu0 0.0
        %222 = vmatpush1.msra.mxu0 0.0
        %223 = vmatprep.subr.mxu0 0.0
        %224 = vmatpush1.msra.mxu0 0.0
        %225 = vmatprep.subr.mxu0 0.0
        %226 = vmatpush1.msra.mxu0 0.0
        %227 = vmatprep.subr.mxu0 0.0
        %228 = vmatpush1.msra.mxu0 0.0
        %229 = vmatprep.subr.mxu0 0.0
        %230 = vmatpush1.msra.mxu0 0.0
        %231 = vmatprep.subr.mxu0 0.0
        %232 = vmatpush1.msra.mxu0 0.0
        %233 = vmatprep.subr.mxu0 0.0
        %234 = vmatpush1.msra.mxu0 0.0
        %235 = vmatprep.subr.mxu0 0.0
        %236 = vmatpush1.msra.mxu0 0.0
        %237 = vmatprep.subr.mxu0 0.0
        %238 = vmatpush1.msra.mxu0 0.0
        %239 = vmatprep.subr.mxu0 0.0
        %240 = vmatpush1.msra.mxu0 0.0
        %241 = vmatprep.subr.mxu0 0.0
        %242 = vmatpush1.msra.mxu0 0.0
        %243 = vmatprep.subr.mxu0 0.0
        %244 = vmatpush1.msra.mxu0 0.0
        %245 = vmatprep.subr.mxu0 0.0
        %246 = vmatpush1.msra.mxu0 0.0
        %247 = vmatprep.subr.mxu0 0.0
        %248 = vmatpush1.msra.mxu0 0.0
        %249 = vmatprep.subr.mxu0 0.0
        %250 = vmatpush1.msra.mxu0 0.0
        %251 = vmatprep.subr.mxu0 0.0
        %252 = vmatpush1.msra.mxu0 0.0
        %253 = vmatprep.subr.mxu0 0.0
        %254 = vmatpush1.msra.mxu0 0.0
        %255 = vmatprep.subr.mxu0 0.0
        %256 = vmatpush1.msra.mxu0 0.0
        %257 = vmatprep.subr.mxu0 0.0
        %258 = vmatpush1.msra.mxu0 0.0
        %259 = vmatprep.subr.mxu0 0.0
        %260 = vmatpush1.msra.mxu0 0.0
        %261 = vmatprep.subr.mxu0 0.0
        %262 = vmatpush1.msra.mxu0 0.0
        %263 = vmatprep.subr.mxu0 0.0
        %264 = vmatpush1.msra.mxu0 0.0
        %265 = vmatprep.subr.mxu0 0.0
        %266 = vmatpush1.msra.mxu0 0.0
        %267 = vmatprep.subr.mxu0 0.0
        %268 = vmatpush1.msra.mxu0 0.0
        %269 = vmatprep.subr.mxu0 0.0
        %270 = vmatpush1.msra.mxu0 0.0
        %271 = vmatprep.subr.mxu0 0.0
        %272 = vmatpush1.msra.mxu0 0.0
        %273 = vmatprep.subr.mxu0 0.0
        %274 = vmatpush1.msra.mxu0 0.0
        %275 = vmatprep.subr.mxu0 0.0
        %276 = vmatpush1.msra.mxu0 0.0
        %277 = vmatprep.subr.mxu0 0.0
        %278 = vmatpush1.msra.mxu0 0.0
        %279 = vmatprep.subr.mxu0 0.0
        %280 = vmatpush1.msra.mxu0 0.0
        %281 = vmatprep.subr.mxu0 0.0
        %282 = vmatpush1.msra.mxu0 0.0
        %283 = vmatprep.mubr.f32.mxu0 0.0
        %284 = vmatmul.mubr.f32.gmra.mrb[0].mxu0 %v212
        %v285 = vpop.f32.mrb[0].mxu0
        %v286 = vadd.f32 0.0, %v285
        %v287 = vpop.f32.mrb[0].mxu0
        %v288 = vadd.f32 0.0, %v287
        %289 = vdwg.mxu0
        %290 = vst [vmem:[%s199] sm:$0xff] %v286
        %291 = vst [vmem:[%s199 + $0x8] sm:$0xff] %v288
        %s292 = sand.u32 %s104, 1
        %s293 = scalar_lea.sflag [#allocation4], %s292
        %s294 = sand.u32 %s104, 1
        %s295 = smul.addr %s294, 16
        %s296 = scalar_lea.vmem [#allocation5], %s295
        // Predicated region
        $region33: #{tpu_custom_call.1} parent=27 // pred_check
          %p297 = pneg %p114
        $region34: #{tpu_custom_call.1} parent=27 // pred_check_branch
          %299 = sbr.rel (%p297) target = $region36
        $region35: #{tpu_custom_call.1} parent=27 // pred_region
          %s300 = smul.u32 2, %s26
          %s302 = ssub.s32 256, 256
          %303 = vsyncadd %s293, %s302
          %s304 = smul.addr %s25, 2
          %s305 = sadd.s32 %s300, %s304
          %s306 = smul.addr %s24, 2
          %s307 = sadd.s32 %s305, %s306
          %s308 = smul.addr %s307, 128
          %s309 = scalar_lea.hbm %s2, %s308
          %s311 = sshll.u32 %s296, 4
          %s312 = int_to_ptr.vmem [resolvable:$true] %s311
          %314 = dma.vmem_to_hbm [thread:$0]  %s312, 256, %s309, %s293
        $region36: #{tpu_custom_call.1} parent=27 // pred_fallthru
          _
      $region28: #{tpu_custom_call.1} parent=5 // pred_fallthru
        _
      %p315 = scmp.le.s32.totalorder 2, %s14
      // Predicated region
      $region37: #{tpu_custom_call.1} parent=5 // pred_check
        %p316 = pneg %p315
      $region38: #{tpu_custom_call.1} parent=5 // pred_check_branch
        %318 = sbr.rel (%p316) target = $region40
      $region39: #{tpu_custom_call.1} parent=5 // pred_region
        %s319 = ssub.s32 %s14, 2
        // Predicated region
        $region41: #{tpu_custom_call.1} parent=39 // pred_check
          %p320 = pneg %p120
        $region42: #{tpu_custom_call.1} parent=39 // pred_check_branch
          %322 = sbr.rel (%p320) target = $region44
        $region43: #{tpu_custom_call.1} parent=39 // pred_region
          %s323 = sand.u32 %s105, 1
          %s324 = scalar_lea.sflag [#allocation4], %s323
          %s325 = sand.u32 %s105, 1
          %s326 = smul.addr %s325, 16
          %s327 = scalar_lea.vmem [#allocation5], %s326
          %328 = dma.done %s324, 256
        $region44: #{tpu_custom_call.1} parent=39 // pred_fallthru
          _
      $region40: #{tpu_custom_call.1} parent=5 // pred_fallthru
        _
    $region6: #{tpu_custom_call.1} parent=1 // loop_footer
      %s18 = sadd.s32 1, %s14
    $region7: #{tpu_custom_call.1} parent=1 // loop_footer_branch
      %13 = sbr.rel target = $region3
    $region8: #{tpu_custom_call.1} parent=1 // loop_exit
      _
    %329 = vsyncpa [#allocation3], 1
    %s330 = scalar_lea.sflag [#allocation3], 1
    %331 = vsyncpa %s330, 1
    %332 = vsyncpa [#allocation4], 1
    %s333 = scalar_lea.sflag [#allocation4], 1
    %334 = vsyncpa %s333, 1

</llo_original>
